<compile_context>
chip_gen: v6e
topology: v6e:2x2x1
jax: 0.10.0
libtpu: 0.0.40
codegen_flags: <defaults>
</compile_context>

<pallas_src>
import jax
import jax.numpy as jnp
from jax import lax
from jax.experimental import pallas as pl
from jax.experimental.pallas import tpu as pltpu


# ----------------------------------------------------------------------------
# helpers
# ----------------------------------------------------------------------------
def _cdiv(a, b):
    return -(-a // b)


def _round_up(x, n):
    return _cdiv(x, n) * n


def _sublane_multiple(dtype):
    return {4: 8, 2: 16, 1: 32}.get(jnp.dtype(dtype).itemsize, 8)


def _vmem_budget_bytes():
    """Generation-aware VMEM budget (v7x: 64 MiB physical, v5e/v6e: 128 MiB)."""
    try:
        kind = jax.devices()[0].device_kind.lower()
    except Exception:
        kind = ""
    if "v7" in kind or "7x" in kind:
        return 48 * 1024 * 1024
    return 100 * 1024 * 1024


def _layer_norm(v_f32, g_f32, b_f32, real_dim, eps):
    """LayerNorm over the last (lane-padded) dim using the *real* feature
    count.  Padded lanes of `v_f32` must be exact zeros; padded gamma/beta are
    zeros so padded output lanes stay zero."""
    d_pad = v_f32.shape[-1]
    inv_n = 1.0 / float(real_dim)
    mu = jnp.sum(v_f32, axis=-1, keepdims=True) * inv_n
    diff = v_f32 - mu
    if d_pad != real_dim:
        lane = lax.broadcasted_iota(jnp.int32, v_f32.shape, 1)
        diff = jnp.where(lane < real_dim, diff, 0.0)
    var = jnp.sum(diff * diff, axis=-1, keepdims=True) * inv_n
    vn = diff * lax.rsqrt(var + eps)
    return vn * g_f32 + b_f32


# ----------------------------------------------------------------------------
# kernel bodies (specialized on static flags)
# ----------------------------------------------------------------------------
def _make_resident_kernel(residual, layer_order, din_real, dout_real, eps=1e-5):
    """Single-pass kernel; W1/W2 fully VMEM resident, grid only over M."""

    def kernel(x_ref, w1_ref, b1_ref, w2_ref, b2_ref, g_ref, beta_ref, o_ref):
        xin = x_ref[...]
        if layer_order == "pre":
            g = g_ref[...].astype(jnp.float32)
            b = beta_ref[...].astype(jnp.float32)
            xin = _layer_norm(xin.astype(jnp.float32), g, b, din_real,
                              eps).astype(x_ref.dtype)
        h = jnp.dot(xin, w1_ref[...], preferred_element_type=jnp.float32)
        h = jnp.maximum(h + b1_ref[...].astype(jnp.float32), 0.0)
        y = jnp.dot(h.astype(w2_ref.dtype), w2_ref[...],
                    preferred_element_type=jnp.float32)
        y = y + b2_ref[...].astype(jnp.float32)
        # Dropout(p=0.1) == identity in eval mode.
        if residual:
            y = y + x_ref[...].astype(jnp.float32)
        if layer_order == "post":
            g = g_ref[...].astype(jnp.float32)
            b = beta_ref[...].astype(jnp.float32)
            y = _layer_norm(y, g, b, dout_real, eps)
        o_ref[...] = y.astype(o_ref.dtype)

    return kernel


def _make_ktiled_kernel(residual, layer_order, din_real, dout_real, eps=1e-5):
    """Fallback: hidden dim is a reduction grid axis with an f32 accumulator."""
    use_xn = (layer_order == "pre")

    def kernel(x_ref, w1_ref, b1_ref, w2_ref, b2_ref, g_ref, beta_ref,
               o_ref, acc_ref, *scratch):
        k = pl.program_id(1)

        if use_xn:
            xn_ref = scratch[0]

            @pl.when(k == 0)
            def _pre_ln():
                g = g_ref[...].astype(jnp.float32)
                b = beta_ref[...].astype(jnp.float32)
                xn_ref[...] = _layer_norm(x_ref[...].astype(jnp.float32),
                                          g, b, din_real,
                                          eps).astype(xn_ref.dtype)

            xin = xn_ref[...]
        else:
            xin = x_ref[...]

        h = jnp.dot(xin, w1_ref[...], preferred_element_type=jnp.float32)
        h = jnp.maximum(h + b1_ref[...].astype(jnp.float32), 0.0)
        prod = jnp.dot(h.astype(w2_ref.dtype), w2_ref[...],
                       preferred_element_type=jnp.float32)

        @pl.when(k == 0)
        def _first():
            acc_ref[...] = prod          # no separate zero-init store

        @pl.when(k > 0)
        def _rest():
            acc_ref[...] += prod

        @pl.when(k == pl.num_programs(1) - 1)
        def _finalize():
            y = acc_ref[...] + b2_ref[...].astype(jnp.float32)
            # Dropout(p=0.1) == identity in eval mode.
            if residual:
                y = y + x_ref[...].astype(jnp.float32)
            if layer_order == "post":
                g = g_ref[...].astype(jnp.float32)
                b = beta_ref[...].astype(jnp.float32)
                y = _layer_norm(y, g, b, dout_real, eps)
            o_ref[...] = y.astype(o_ref.dtype)

    return kernel


# ----------------------------------------------------------------------------
# parameter preparation (pad ONCE, not per call)
# ----------------------------------------------------------------------------
def prepare_mlp_params(params, compute_dtype=None):
    """Pads parameters to lane-dense (128-multiple) shapes once.

    compute_dtype (e.g. jnp.bfloat16) optionally casts the matmul weights;
    accumulation / LN statistics stay f32 inside the kernel.
    """
    w1, b1, w2, b2, gamma, beta = params
    din, dhid = w1.shape
    dout = w2.shape[1]
    din_p = _round_up(din, 128)
    dhid_p = _round_up(dhid, 128)
    dout_p = _round_up(dout, 128)

    if compute_dtype is not None:
        w1 = w1.astype(compute_dtype)
        w2 = w2.astype(compute_dtype)

    def pad2(a, r, c):
        return jnp.pad(a, ((0, r - a.shape[0]), (0, c - a.shape[1])))

    return {
        "w1": pad2(w1, din_p, dhid_p),
        "b1": jnp.pad(b1, (0, dhid_p - dhid)).reshape(1, dhid_p),
        "w2": pad2(w2, dhid_p, dout_p),
        "b2": jnp.pad(b2, (0, dout_p - dout)).reshape(1, dout_p),
        "gamma": jnp.pad(gamma, (0, din_p - din)).reshape(1, din_p),
        "beta": jnp.pad(beta, (0, din_p - din)).reshape(1, din_p),
        "dims": (din, dhid, dout),
        "compute_dtype": compute_dtype,
    }


# ----------------------------------------------------------------------------
# wrapper
# ----------------------------------------------------------------------------
def mlp_pallas(x, params, *, residual=False, layer_order="none",
               tile_m=None, tile_k=None, force_ktiled=False):
    """x: [..., input_dim]  ->  [..., output_dim]"""
    assert layer_order in ("none", "pre", "post")
    if not isinstance(params, dict):
        params = prepare_mlp_params(params)

    din, dhid, dout = params["dims"]
    if residual:
        assert din == dout
    if layer_order == "post":
        # The module applies LayerNorm(input_dim) to the output.
        assert din == dout, "post-LN requires input_dim == output_dim"

    w1_p, b1_p = params["w1"], params["b1"]
    w2_p, b2_p = params["w2"], params["b2"]
    g_p, be_p = params["gamma"], params["beta"]
    compute_dtype = params.get("compute_dtype")

    din_p, dhid_p = w1_p.shape
    dout_p = w2_p.shape[1]

    orig_shape = x.shape
    out_dtype = x.dtype
    x2 = x.reshape(-1, din)
    if compute_dtype is not None:
        x2 = x2.astype(compute_dtype)
    in_dtype = x2.dtype
    m = x2.shape[0]
    itemsize = jnp.dtype(in_dtype).itemsize
    out_itemsize = jnp.dtype(out_dtype).itemsize
    sub = _sublane_multiple(in_dtype)
    budget = _vmem_budget_bytes()

    # --- adaptive, sublane-packed M tiling (balanced, minimal padding) -----
    def choose_m_tiling(target):
        target = max(sub, (target // sub) * sub)
        m_sub = _round_up(m, sub)
        if m_sub <= target:
            return m_sub, 1
        n = _cdiv(m_sub, target)
        t = _round_up(_cdiv(m_sub, n), sub)
        return t, n

    # --- tile_k as a divisor of the 128-padded hidden dim ------------------
    def choose_k_tile(target):
        target = max(128, (target // 128) * 128)
        nb = dhid_p // 128
        best = 1
        for d in range(1, min(nb, target // 128) + 1):
            if nb % d == 0:
                best = d
        return best * 128

    # --- VMEM footprint estimates (conservative: 2x buffering everywhere) --
    def footprint_resident(tm_):
        w_bytes = 2 * (din_p * dhid_p + dhid_p * dout_p) * itemsize
        io_bytes = 2 * tm_ * (din_p * itemsize + dout_p * out_itemsize)
        small = 2 * 8 * (dhid_p + dout_p + 2 * din_p) * itemsize
        temps = tm_ * (dhid_p + dout_p) * 4
        if layer_order == "pre":
            temps += tm_ * din_p * 4
        return w_bytes + io_bytes + small + temps

    def footprint_ktiled(tm_, tk_):
        w_bytes = 2 * (din_p * tk_ + tk_ * dout_p) * itemsize
        io_bytes = 2 * tm_ * (din_p * itemsize + dout_p * out_itemsize)
        acc = tm_ * dout_p * 4
        xn = tm_ * din_p * itemsize if layer_order == "pre" else 0
        small = 2 * 8 * (tk_ + dout_p + 2 * din_p) * itemsize
        temps = tm_ * (tk_ + dout_p) * 4
        return w_bytes + io_bytes + acc + xn + small + temps

    target_m = tile_m if tile_m is not None else 512
    cap = int(0.8 * budget)

    use_resident = False
    tm, n_m = choose_m_tiling(target_m)
    if not force_ktiled:
        for cand in (target_m, 256, 128, 8 * sub):
            t, n = choose_m_tiling(cand)
            if footprint_resident(t) <= cap:
                tm, n_m, use_resident = t, n, True
                break

    if not use_resident:
        tm, n_m = choose_m_tiling(target_m)
        tk = choose_k_tile(tile_k if tile_k is not None else 512)
        while footprint_ktiled(tm, tk) > cap:
            if tm > max(sub, 64):
                tm, n_m = choose_m_tiling(max(sub, tm // 2))
            elif tk > 128:
                tk = choose_k_tile(tk // 2)
            else:
                break

    m_p = n_m * tm
    x_p = jnp.pad(x2, ((0, m_p - m), (0, din_p - din)))

    compiler_params_common = dict(vmem_limit_bytes=budget)

    if use_resident:
        kernel = _make_resident_kernel(residual, layer_order, din, dout)
        out = pl.pallas_call(
            kernel,
            out_shape=jax.ShapeDtypeStruct((m_p, dout_p), out_dtype),
            grid_spec=pltpu.PrefetchScalarGridSpec(
                num_scalar_prefetch=0,
                grid=(n_m,),
                in_specs=[
                    pl.BlockSpec((tm, din_p), lambda i: (i, 0)),      # x rows
                    pl.BlockSpec((din_p, dhid_p), lambda i: (0, 0)),  # W1 (resident)
                    pl.BlockSpec((1, dhid_p), lambda i: (0, 0)),      # b1
                    pl.BlockSpec((dhid_p, dout_p), lambda i: (0, 0)), # W2 (resident)
                    pl.BlockSpec((1, dout_p), lambda i: (0, 0)),      # b2
                    pl.BlockSpec((1, din_p), lambda i: (0, 0)),       # LN gamma
                    pl.BlockSpec((1, din_p), lambda i: (0, 0)),       # LN beta
                ],
                out_specs=pl.BlockSpec((tm, dout_p), lambda i: (i, 0)),
            ),
            compiler_params=pltpu.CompilerParams(
                dimension_semantics=("parallel",), **compiler_params_common),
        )(x_p, w1_p, b1_p, w2_p, b2_p, g_p, be_p)
    else:
        kernel = _make_ktiled_kernel(residual, layer_order, din, dout)
        scratch = [pltpu.VMEM((tm, dout_p), jnp.float32)]       # f32 accumulator
        if layer_order == "pre":
            scratch.append(pltpu.VMEM((tm, din_p), in_dtype))   # pre-LN'd input
        out = pl.pallas_call(
            kernel,
            out_shape=jax.ShapeDtypeStruct((m_p, dout_p), out_dtype),
            grid_spec=pltpu.PrefetchScalarGridSpec(
                num_scalar_prefetch=0,
                grid=(n_m, dhid_p // tk),
                in_specs=[
                    pl.BlockSpec((tm, din_p), lambda i, k: (i, 0)),   # x rows
                    pl.BlockSpec((din_p, tk), lambda i, k: (0, k)),   # W1 slice
                    pl.BlockSpec((1, tk), lambda i, k: (0, k)),       # b1 slice
                    pl.BlockSpec((tk, dout_p), lambda i, k: (k, 0)),  # W2 slice
                    pl.BlockSpec((1, dout_p), lambda i, k: (0, 0)),   # b2
                    pl.BlockSpec((1, din_p), lambda i, k: (0, 0)),    # LN gamma
                    pl.BlockSpec((1, din_p), lambda i, k: (0, 0)),    # LN beta
                ],
                out_specs=pl.BlockSpec((tm, dout_p), lambda i, k: (i, 0)),
                scratch_shapes=scratch,
            ),
            compiler_params=pltpu.CompilerParams(
                dimension_semantics=("parallel", "arbitrary"),
                **compiler_params_common),
        )(x_p, w1_p, b1_p, w2_p, b2_p, g_p, be_p)

    out = out[:m, :dout]
    return out.reshape(orig_shape[:-1] + (dout,))


# ----------------------------------------------------------------------------
# parameter init + pure-JAX reference
# ----------------------------------------------------------------------------
def init_mlp_params(key, input_dim, hidden_dim, output_dim, dtype=jnp.float32):
    """nn.Linear/nn.LayerNorm-shaped params; Linear weights stored (in, out)."""
    k1, k2, k3, k4 = jax.random.split(key, 4)
    lim1 = 1.0 / jnp.sqrt(input_dim)
    lim2 = 1.0 / jnp.sqrt(hidden_dim)
    w1 = jax.random.uniform(k1, (input_dim, hidden_dim), dtype, -lim1, lim1)
    b1 = jax.random.uniform(k2, (hidden_dim,), dtype, -lim1, lim1)
    w2 = jax.random.uniform(k3, (hidden_dim, output_dim), dtype, -lim2, lim2)
    b2 = jax.random.uniform(k4, (output_dim,), dtype, -lim2, lim2)
    gamma = jnp.ones((input_dim,), dtype)   # LayerNorm weight
    beta = jnp.zeros((input_dim,), dtype)   # LayerNorm bias
    return (w1, b1, w2, b2, gamma, beta)


def mlp_reference(x, params, *, residual, layer_order, eps=1e-5):
    w1, b1, w2, b2, gamma, beta = params
    inp = x

    def ln(v):
        mu = jnp.mean(v, axis=-1, keepdims=True)
        var = jnp.mean((v - mu) ** 2, axis=-1, keepdims=True)
        return (v - mu) / jnp.sqrt(var + eps) * gamma + beta

    if layer_order == "pre":
        x = ln(x)
    x = jnp.maximum(x @ w1 + b1, 0.0)
    x = x @ w2 + b2
    if residual:
        x = x + inp
    if layer_order == "post":
        x = ln(x)
    return x


# ----------------------------------------------------------------------------
# self-test
# ----------------------------------------------------------------------------
if __name__ == "__main__":
    batch, seq = 2, 8
    input_dim, hidden_dim, output_dim = 32, 64, 32   # residual needs din == dout

    key = jax.random.PRNGKey(0)
    kx, kp, kx2 = jax.random.split(key, 3)
    x = jax.random.normal(kx, (batch, seq, input_dim), jnp.float32)
    params = init_mlp_params(kp, input_dim, hidden_dim, output_dim)
    prepared = prepare_mlp_params(params)          # pad weights once

    configs = [
        (True, "pre"),
        (True, "post"),
        (False, "none"),
    ]

    # resident (weights-in-VMEM) path
    for residual, layer_order in configs:
        out = mlp_pallas(x, prepared, residual=residual, layer_order=layer_order)
        out = jax.block_until_ready(out)
        ref = mlp_reference(x, params, residual=residual, layer_order=layer_order)
        assert out.shape == (batch, seq, output_dim)
        err = float(jnp.max(jnp.abs(out - ref)))
        assert jnp.allclose(out, ref, atol=2e-4, rtol=2e-4), (
            "resident", residual, layer_order, err)

    # k-tiled fallback path (forced, with multiple hidden slices)
    for residual, layer_order in configs:
        out = mlp_pallas(x, prepared, residual=residual, layer_order=layer_order,
                         force_ktiled=True, tile_k=128)
        out = jax.block_until_ready(out)
        ref = mlp_reference(x, params, residual=residual, layer_order=layer_order)
        err = float(jnp.max(jnp.abs(out - ref)))
        assert jnp.allclose(out, ref, atol=2e-4, rtol=2e-4), (
            "ktiled", residual, layer_order, err)

    # ragged row count (m not a multiple of the sublane pack)
    x_ragged = jax.random.normal(kx2, (3, 7, input_dim), jnp.float32)
    out = jax.block_until_ready(
        mlp_pallas(x_ragged, prepared, residual=True, layer_order="pre"))
    ref = mlp_reference(x_ragged, params, residual=True, layer_order="pre")
    assert out.shape == (3, 7, output_dim)
    assert jnp.allclose(out, ref, atol=2e-4, rtol=2e-4)

    print("KERNEL_OK")
</pallas_src>

<mosaic_0001>
module attributes {stable_mosaic.version = 11 : i64} {
  func.func @kernel(%arg0: i32, %arg1: memref<16x128xf32, #tpu.memory_space<vmem>>, %arg2: memref<128x128xf32, #tpu.memory_space<vmem>>, %arg3: memref<1x128xf32, #tpu.memory_space<vmem>>, %arg4: memref<128x128xf32, #tpu.memory_space<vmem>>, %arg5: memref<1x128xf32, #tpu.memory_space<vmem>>, %arg6: memref<1x128xf32, #tpu.memory_space<vmem>>, %arg7: memref<1x128xf32, #tpu.memory_space<vmem>>, %arg8: memref<16x128xf32, #tpu.memory_space<vmem>>) attributes {dimension_semantics = [#tpu.dimension_semantics<parallel>], iteration_bounds = array<i64: 1>, scalar_prefetch = 0 : i64, scratch_operands = 0 : i64, tpu.core_type = #tpu.core_type<tc>, window_params = [{transform_indices = @transform_0, window_bounds = array<i64: 16, 128>}, {pipeline_mode = #tpu.pipeline_mode<synchronous>, transform_indices = @transform_1, window_bounds = array<i64: 128, 128>}, {pipeline_mode = #tpu.pipeline_mode<synchronous>, transform_indices = @transform_2, window_bounds = array<i64: 1, 128>}, {pipeline_mode = #tpu.pipeline_mode<synchronous>, transform_indices = @transform_3, window_bounds = array<i64: 128, 128>}, {pipeline_mode = #tpu.pipeline_mode<synchronous>, transform_indices = @transform_4, window_bounds = array<i64: 1, 128>}, {pipeline_mode = #tpu.pipeline_mode<synchronous>, transform_indices = @transform_5, window_bounds = array<i64: 1, 128>}, {pipeline_mode = #tpu.pipeline_mode<synchronous>, transform_indices = @transform_6, window_bounds = array<i64: 1, 128>}, {transform_indices = @transform_7, window_bounds = array<i64: 16, 128>}]} {
    %c0 = arith.constant 0 : index
    %c0_0 = arith.constant 0 : index
    %0 = vector.load %arg1[%c0, %c0_0] : memref<16x128xf32, #tpu.memory_space<vmem>>, vector<16x128xf32>
    %c0_1 = arith.constant 0 : index
    %c0_2 = arith.constant 0 : index
    %1 = vector.load %arg6[%c0_1, %c0_2] : memref<1x128xf32, #tpu.memory_space<vmem>>, vector<1x128xf32>
    %c0_3 = arith.constant 0 : index
    %c0_4 = arith.constant 0 : index
    %2 = vector.load %arg7[%c0_3, %c0_4] : memref<1x128xf32, #tpu.memory_space<vmem>>, vector<1x128xf32>
    %cst = arith.constant dense<0.000000e+00> : vector<16xf32>
    %3 = vector.multi_reduction <add>, %0, %cst [1] : vector<16x128xf32> to vector<16xf32>
    %4 = vector.shape_cast %3 : vector<16xf32> to vector<16x1xf32>
    %cst_5 = arith.constant 3.125000e-02 : f32
    %5 = vector.broadcast %cst_5 : f32 to vector<16x1xf32>
    %6 = arith.mulf %4, %5 : vector<16x1xf32>
    %7 = vector.broadcast %6 : vector<16x1xf32> to vector<16x128xf32>
    %8 = arith.subf %0, %7 : vector<16x128xf32>
    %9 = tpu.iota {dimensions = array<i32: 1>} : vector<16x128xi32>
    %c32_i32 = arith.constant 32 : i32
    %10 = vector.broadcast %c32_i32 : i32 to vector<16x128xi32>
    %11 = arith.cmpi slt, %9, %10 : vector<16x128xi32>
    %cst_6 = arith.constant 0.000000e+00 : f32
    %12 = vector.broadcast %cst_6 : f32 to vector<16x128xf32>
    %13 = arith.select %11, %8, %12 : vector<16x128xi1>, vector<16x128xf32>
    %14 = arith.mulf %13, %13 : vector<16x128xf32>
    %cst_7 = arith.constant dense<0.000000e+00> : vector<16xf32>
    %15 = vector.multi_reduction <add>, %14, %cst_7 [1] : vector<16x128xf32> to vector<16xf32>
    %16 = vector.shape_cast %15 : vector<16xf32> to vector<16x1xf32>
    %cst_8 = arith.constant 3.125000e-02 : f32
    %17 = vector.broadcast %cst_8 : f32 to vector<16x1xf32>
    %18 = arith.mulf %16, %17 : vector<16x1xf32>
    %cst_9 = arith.constant 9.99999974E-6 : f32
    %19 = vector.broadcast %cst_9 : f32 to vector<16x1xf32>
    %20 = arith.addf %18, %19 : vector<16x1xf32>
    %21 = math.rsqrt %20 : vector<16x1xf32>
    %22 = vector.broadcast %21 : vector<16x1xf32> to vector<16x128xf32>
    %23 = arith.mulf %13, %22 : vector<16x128xf32>
    %24 = vector.broadcast %1 : vector<1x128xf32> to vector<16x128xf32>
    %25 = arith.mulf %23, %24 : vector<16x128xf32>
    %26 = vector.broadcast %2 : vector<1x128xf32> to vector<16x128xf32>
    %27 = arith.addf %25, %26 : vector<16x128xf32>
    %c0_10 = arith.constant 0 : index
    %c0_11 = arith.constant 0 : index
    %28 = vector.load %arg2[%c0_10, %c0_11] : memref<128x128xf32, #tpu.memory_space<vmem>>, vector<128x128xf32>
    %cst_12 = arith.constant dense<0.000000e+00> : vector<16x128xf32>
    %29 = tpu.matmul %27, %28, %cst_12 {dimension_numbers = #tpu.dot_dimension_numbers<[1], [0], [0], [1], [0, 0, 1, 1], [], []>} : vector<16x128xf32>, vector<128x128xf32>, vector<16x128xf32> -> vector<16x128xf32>
    %c0_13 = arith.constant 0 : index
    %c0_14 = arith.constant 0 : index
    %30 = vector.load %arg3[%c0_13, %c0_14] : memref<1x128xf32, #tpu.memory_space<vmem>>, vector<1x128xf32>
    %31 = vector.broadcast %30 : vector<1x128xf32> to vector<16x128xf32>
    %32 = arith.addf %29, %31 : vector<16x128xf32>
    %cst_15 = arith.constant 0.000000e+00 : f32
    %33 = vector.broadcast %cst_15 : f32 to vector<16x128xf32>
    %34 = arith.maximumf %32, %33 : vector<16x128xf32>
    %c0_16 = arith.constant 0 : index
    %c0_17 = arith.constant 0 : index
    %35 = vector.load %arg4[%c0_16, %c0_17] : memref<128x128xf32, #tpu.memory_space<vmem>>, vector<128x128xf32>
    %cst_18 = arith.constant dense<0.000000e+00> : vector<16x128xf32>
    %36 = tpu.matmul %34, %35, %cst_18 {dimension_numbers = #tpu.dot_dimension_numbers<[1], [0], [0], [1], [0, 0, 1, 1], [], []>} : vector<16x128xf32>, vector<128x128xf32>, vector<16x128xf32> -> vector<16x128xf32>
    %c0_19 = arith.constant 0 : index
    %c0_20 = arith.constant 0 : index
    %37 = vector.load %arg5[%c0_19, %c0_20] : memref<1x128xf32, #tpu.memory_space<vmem>>, vector<1x128xf32>
    %38 = vector.broadcast %37 : vector<1x128xf32> to vector<16x128xf32>
    %39 = arith.addf %36, %38 : vector<16x128xf32>
    %c0_21 = arith.constant 0 : index
    %c0_22 = arith.constant 0 : index
    %40 = vector.load %arg1[%c0_21, %c0_22] : memref<16x128xf32, #tpu.memory_space<vmem>>, vector<16x128xf32>
    %41 = arith.addf %39, %40 : vector<16x128xf32>
    %c0_23 = arith.constant 0 : index
    %c0_24 = arith.constant 0 : index
    %42 = vector.load %arg8[%c0_23, %c0_24] : memref<16x128xf32, #tpu.memory_space<vmem>>, vector<16x128xf32>
    tpu.vector_store %arg8[%c0_23, %c0_24], %41 {strides = array<i32>} : memref<16x128xf32, #tpu.memory_space<vmem>>, vector<16x128xf32>,
    return
  }
  func.func @transform_0(%arg0: i32) -> (i32, i32) {
    %c0_i32 = arith.constant 0 : i32
    %c0_i32_0 = arith.constant 0 : i32
    return %arg0, %c0_i32 : i32, i32
  }
  func.func @transform_1(%arg0: i32) -> (i32, i32) {
    %c0_i32 = arith.constant 0 : i32
    %c0_i32_0 = arith.constant 0 : i32
    %c0_i32_1 = arith.constant 0 : i32
    return %c0_i32, %c0_i32_0 : i32, i32
  }
  func.func @transform_2(%arg0: i32) -> (i32, i32) {
    %c0_i32 = arith.constant 0 : i32
    %c0_i32_0 = arith.constant 0 : i32
    %c0_i32_1 = arith.constant 0 : i32
    return %c0_i32, %c0_i32_0 : i32, i32
  }
  func.func @transform_3(%arg0: i32) -> (i32, i32) {
    %c0_i32 = arith.constant 0 : i32
    %c0_i32_0 = arith.constant 0 : i32
    %c0_i32_1 = arith.constant 0 : i32
    return %c0_i32, %c0_i32_0 : i32, i32
  }
  func.func @transform_4(%arg0: i32) -> (i32, i32) {
    %c0_i32 = arith.constant 0 : i32
    %c0_i32_0 = arith.constant 0 : i32
    %c0_i32_1 = arith.constant 0 : i32
    return %c0_i32, %c0_i32_0 : i32, i32
  }
  func.func @transform_5(%arg0: i32) -> (i32, i32) {
    %c0_i32 = arith.constant 0 : i32
    %c0_i32_0 = arith.constant 0 : i32
    %c0_i32_1 = arith.constant 0 : i32
    return %c0_i32, %c0_i32_0 : i32, i32
  }
  func.func @transform_6(%arg0: i32) -> (i32, i32) {
    %c0_i32 = arith.constant 0 : i32
    %c0_i32_0 = arith.constant 0 : i32
    %c0_i32_1 = arith.constant 0 : i32
    return %c0_i32, %c0_i32_0 : i32, i32
  }
  func.func @transform_7(%arg0: i32) -> (i32, i32) {
    %c0_i32 = arith.constant 0 : i32
    %c0_i32_0 = arith.constant 0 : i32
    return %arg0, %c0_i32 : i32, i32
  }
}

</mosaic_0001>

<llo_original>
// kernel: tpu_custom_call.1
$region0: #{tpu_custom_call.1}
  #allocation0 [shape = 'u32[]', space=smem, size = 0x4, offset = 0x4, fixed_abs, tag = 'smem constant byte address 0x4 - core index']
  #allocation1 [shape = 'u32[144,128]{1,0:T(1,128)}', space=vmem, size = 0x12000, scoped, tag = 'internal scratch']
  %s0 = inlined_call_operand.hbm [shape: f32[16,128], index: 0, kind: input, shape index: {}]
  %s1 = inlined_call_operand.hbm [shape: f32[128,128], index: 1, kind: input, shape index: {}]
  %s2 = inlined_call_operand.vmem [shape: f32[1,128], index: 2, kind: input, shape index: {}]
  %s3 = inlined_call_operand.hbm [shape: f32[128,128], index: 3, kind: input, shape index: {}]
  %s4 = inlined_call_operand.vmem [shape: f32[1,128], index: 4, kind: input, shape index: {}]
  %s5 = inlined_call_operand.vmem [shape: f32[1,128], index: 5, kind: input, shape index: {}]
  %s6 = inlined_call_operand.vmem [shape: f32[1,128], index: 6, kind: input, shape index: {}]
  %s7 = inlined_call_operand.hbm [shape: f32[16,128], index: 7, kind: output, shape index: {}]
  %s8 = sld [smem:[#allocation0]]
  $region50: #{tpu_custom_call.1} parent=0
    _
  %s10 = ssub.s32 1, %s8
  %s11 = scalar_select 0, %s10, %s8
  $region1: #{tpu_custom_call.1} parent=0
    #allocation2 [shape = 'u8[8192]{0}', space=vmem, size = 0x2000, scoped, tag = 'input window, operand 0, single buffered']
    #allocation3 [shape = 's32[1]{0}', space=sflag, size = 0x4, scoped, tag = 'scoped memory for tpu_custom_call.1']
    #allocation4 [shape = 's32[1]{0}', space=sflag, size = 0x4, scoped, tag = 'scoped memory for tpu_custom_call.1']
    #allocation5 [shape = 'u8[65536]{0}', space=vmem, size = 0x10000, scoped, tag = 'input window, operand 1, single buffered']
    #allocation6 [shape = 's32[1]{0}', space=sflag, size = 0x4, scoped, tag = 'scoped memory for tpu_custom_call.1']
    #allocation7 [shape = 'u8[65536]{0}', space=vmem, size = 0x10000, scoped, tag = 'input window, operand 3, single buffered']
    #allocation8 [shape = 'u8[8192]{0}', space=vmem, size = 0x2000, scoped, tag = 'output window, operand 0, single buffered']
    %12 = vsyncpa [#allocation3], 0
    %13 = vsyncpa [#allocation6], 0
    %14 = vsyncpa [#allocation4], 0
    // Predicated region
    $region2: #{tpu_custom_call.1} parent=1 // pred_check
      _
    $region3: #{tpu_custom_call.1} parent=1 // pred_check_branch
      %16 = sbr.rel (0) target = $region5
    $region4: #{tpu_custom_call.1} parent=1 // pred_region
      %s18 = ssub.s32 256, 256
      %19 = vsyncadd [#allocation3], %s18
      %s20 = sshll.u32 [#allocation2], 4
      %s21 = int_to_ptr.vmem [resolvable:$true] %s20
      %26 = dma.hbm_to_vmem [thread:$0]  %s0, 256, %s21, [#allocation3], 128, 128, 8
    $region5: #{tpu_custom_call.1} parent=1 // pred_fallthru
      _
    // Predicated region
    $region6: #{tpu_custom_call.1} parent=1 // pred_check
      _
    $region7: #{tpu_custom_call.1} parent=1 // pred_check_branch
      %28 = sbr.rel (0) target = $region9
    $region8: #{tpu_custom_call.1} parent=1 // pred_region
      %s30 = ssub.s32 2048, 2048
      %31 = vsyncadd [#allocation6], %s30
      %s32 = sshll.u32 [#allocation5], 4
      %s33 = int_to_ptr.vmem [resolvable:$true] %s32
      %38 = dma.hbm_to_vmem [thread:$0]  %s1, 2048, %s33, [#allocation6], 128, 128, 8
    $region9: #{tpu_custom_call.1} parent=1 // pred_fallthru
      _
    // Predicated region
    $region10: #{tpu_custom_call.1} parent=1 // pred_check
      _
    $region11: #{tpu_custom_call.1} parent=1 // pred_check_branch
      %40 = sbr.rel (0) target = $region13
    $region12: #{tpu_custom_call.1} parent=1 // pred_region
      _
    $region13: #{tpu_custom_call.1} parent=1 // pred_fallthru
      _
    // Predicated region
    $region14: #{tpu_custom_call.1} parent=1 // pred_check
      _
    $region15: #{tpu_custom_call.1} parent=1 // pred_check_branch
      %42 = sbr.rel (0) target = $region17
    $region16: #{tpu_custom_call.1} parent=1 // pred_region
      %s44 = ssub.s32 2048, 2048
      %45 = vsyncadd [#allocation6], %s44
      %s46 = sshll.u32 [#allocation7], 4
      %s47 = int_to_ptr.vmem [resolvable:$true] %s46
      %52 = dma.hbm_to_vmem [thread:$0]  %s3, 2048, %s47, [#allocation6], 128, 128, 8
    $region17: #{tpu_custom_call.1} parent=1 // pred_fallthru
      _
    // Predicated region
    $region18: #{tpu_custom_call.1} parent=1 // pred_check
      _
    $region19: #{tpu_custom_call.1} parent=1 // pred_check_branch
      %54 = sbr.rel (0) target = $region21
    $region20: #{tpu_custom_call.1} parent=1 // pred_region
      _
    $region21: #{tpu_custom_call.1} parent=1 // pred_fallthru
      _
    // Predicated region
    $region22: #{tpu_custom_call.1} parent=1 // pred_check
      _
    $region23: #{tpu_custom_call.1} parent=1 // pred_check_branch
      %56 = sbr.rel (0) target = $region25
    $region24: #{tpu_custom_call.1} parent=1 // pred_region
      _
    $region25: #{tpu_custom_call.1} parent=1 // pred_fallthru
      _
    // Predicated region
    $region26: #{tpu_custom_call.1} parent=1 // pred_check
      _
    $region27: #{tpu_custom_call.1} parent=1 // pred_check_branch
      %58 = sbr.rel (0) target = $region29
    $region28: #{tpu_custom_call.1} parent=1 // pred_region
      _
    $region29: #{tpu_custom_call.1} parent=1 // pred_fallthru
      _
    // Predicated region
    $region30: #{tpu_custom_call.1} parent=1 // pred_check
      _
    $region31: #{tpu_custom_call.1} parent=1 // pred_check_branch
      %60 = sbr.rel (0) target = $region33
    $region32: #{tpu_custom_call.1} parent=1 // pred_region
      %61 = dma.done [#allocation3], 256
    $region33: #{tpu_custom_call.1} parent=1 // pred_fallthru
      _
    // Predicated region
    $region34: #{tpu_custom_call.1} parent=1 // pred_check
      _
    $region35: #{tpu_custom_call.1} parent=1 // pred_check_branch
      %63 = sbr.rel (0) target = $region37
    $region36: #{tpu_custom_call.1} parent=1 // pred_region
      %64 = dma.done [#allocation6], 2048
    $region37: #{tpu_custom_call.1} parent=1 // pred_fallthru
      _
    // Predicated region
    $region38: #{tpu_custom_call.1} parent=1 // pred_check
      _
    $region39: #{tpu_custom_call.1} parent=1 // pred_check_branch
      %66 = sbr.rel (0) target = $region41
    $region40: #{tpu_custom_call.1} parent=1 // pred_region
      %67 = dma.done [#allocation6], 2048
    $region41: #{tpu_custom_call.1} parent=1 // pred_fallthru
      _
    %v68 = vld [vmem:[#allocation2] sm:$0xff]
    %v69 = vld [vmem:[#allocation2 + $0x8] sm:$0xff]
    %v70 = vld [vmem:[%s5] sm:$0x1]
    %v71 = vld [vmem:[%s6] sm:$0x1]
    %72 = vadd.xlane.f32.xlu0 %v68
    %v73 = vpop.xlane.xlu0 %72
    %74 = vadd.xlane.f32.xlu0 %v69
    %v75 = vpop.xlane.xlu0 %74
    %v76 = vmul.f32 %v73, 0.03125
    %v77 = vmul.f32 %v75, 0.03125
    %v78 = vsub.f32 %v68, %v76
    %v79 = vsub.f32 %v69, %v77
    %v80 = vlaneseq
    %v81 = vand.u32 %v80, 127
    %vm82 = vcmp.lt.s32.totalorder %v81, 32
    %v83 = vsel %vm82, %v78, 0.0
    %v84 = vsel %vm82, %v79, 0.0
    %v85 = vmul.f32 %v83, %v83
    %v86 = vmul.f32 %v84, %v84
    %87 = vadd.xlane.f32.xlu0 %v85
    %v88 = vpop.xlane.xlu0 %87
    %89 = vadd.xlane.f32.xlu0 %v86
    %v90 = vpop.xlane.xlu0 %89
    %v91 = vmul.f32 %v88, 0.03125
    %v92 = vmul.f32 %v90, 0.03125
    %v93 = vadd.f32 %v91, 1e-05
    %v94 = vadd.f32 %v92, 1e-05
    %v95 = vrsqrt.pop %v93
    %v96 = vrsqrt.pop %v94
    %v97 = vmul.f32 %v83, %v95
    %v98 = vmul.f32 %v84, %v96
    %v100 = vlaneseq
    %v101 = vshrl.u32 %v100, 7
    %v102 = vsub.s32 0, %v101
    %v103 = vrot.slane %v70, %v102
    %v105 = vmul.f32 %v97, %v103
    %v106 = vmul.f32 %v98, %v103
    %v108 = vlaneseq
    %v109 = vshrl.u32 %v108, 7
    %v110 = vsub.s32 0, %v109
    %v111 = vrot.slane %v71, %v110
    %v113 = vadd.f32 %v105, %v111
    %v114 = vadd.f32 %v106, %v111
    %v115 = vld [vmem:[#allocation5] sm:$0xff]
    %v116 = vld [vmem:[#allocation5 + $0x8] sm:$0xff]
    %v117 = vld [vmem:[#allocation5 + $0x10] sm:$0xff]
    %v118 = vld [vmem:[#allocation5 + $0x18] sm:$0xff]
    %v119 = vld [vmem:[#allocation5 + $0x20] sm:$0xff]
    %v120 = vld [vmem:[#allocation5 + $0x28] sm:$0xff]
    %v121 = vld [vmem:[#allocation5 + $0x30] sm:$0xff]
    %v122 = vld [vmem:[#allocation5 + $0x38] sm:$0xff]
    %v123 = vld [vmem:[#allocation5 + $0x40] sm:$0xff]
    %v124 = vld [vmem:[#allocation5 + $0x48] sm:$0xff]
    %v125 = vld [vmem:[#allocation5 + $0x50] sm:$0xff]
    %v126 = vld [vmem:[#allocation5 + $0x58] sm:$0xff]
    %v127 = vld [vmem:[#allocation5 + $0x60] sm:$0xff]
    %v128 = vld [vmem:[#allocation5 + $0x68] sm:$0xff]
    %v129 = vld [vmem:[#allocation5 + $0x70] sm:$0xff]
    %v130 = vld [vmem:[#allocation5 + $0x78] sm:$0xff]
    %v131 = vld [vmem:[%s2] sm:$0x1]
    %v133 = vlaneseq
    %v134 = vshrl.u32 %v133, 7
    %v135 = vsub.s32 0, %v134
    %v136 = vrot.slane %v131, %v135
    %138 = vmatprep.subr.mxu0 0.0
    %139 = vmatpush1.msra.mxu0 %v130
    %140 = vmatprep.subr.mxu0 0.0
    %141 = vmatpush1.msra.mxu0 %v129
    %142 = vmatprep.subr.mxu0 0.0
    %143 = vmatpush1.msra.mxu0 %v128
    %144 = vmatprep.subr.mxu0 0.0
    %145 = vmatpush1.msra.mxu0 %v127
    %146 = vmatprep.subr.mxu0 0.0
    %147 = vmatpush1.msra.mxu0 %v126
    %148 = vmatprep.subr.mxu0 0.0
    %149 = vmatpush1.msra.mxu0 %v125
    %150 = vmatprep.subr.mxu0 0.0
    %151 = vmatpush1.msra.mxu0 %v124
    %152 = vmatprep.subr.mxu0 0.0
    %153 = vmatpush1.msra.mxu0 %v123
    %154 = vmatprep.subr.mxu0 0.0
    %155 = vmatpush1.msra.mxu0 %v122
    %156 = vmatprep.subr.mxu0 0.0
    %157 = vmatpush1.msra.mxu0 %v121
    %158 = vmatprep.subr.mxu0 0.0
    %159 = vmatpush1.msra.mxu0 %v120
    %160 = vmatprep.subr.mxu0 0.0
    %161 = vmatpush1.msra.mxu0 %v119
    %162 = vmatprep.subr.mxu0 0.0
    %163 = vmatpush1.msra.mxu0 %v118
    %164 = vmatprep.subr.mxu0 0.0
    %165 = vmatpush1.msra.mxu0 %v117
    %166 = vmatprep.subr.mxu0 0.0
    %167 = vmatpush1.msra.mxu0 %v116
    %168 = vmatprep.subr.mxu0 0.0
    %169 = vmatpush1.msra.mxu0 %v115
    %170 = vmatprep.subr.mxu0 0.0
    %171 = vmatpush2.msra.mxu0 0.0
    %172 = vmatprep.subr.mxu0 0.0
    %173 = vmatpush2.msra.mxu0 0.0
    %174 = vmatprep.subr.mxu0 0.0
    %175 = vmatpush2.msra.mxu0 0.0
    %176 = vmatprep.subr.mxu0 0.0
    %177 = vmatpush2.msra.mxu0 0.0
    %178 = vmatprep.subr.mxu0 0.0
    %179 = vmatpush2.msra.mxu0 0.0
    %180 = vmatprep.subr.mxu0 0.0
    %181 = vmatpush2.msra.mxu0 0.0
    %182 = vmatprep.subr.mxu0 0.0
    %183 = vmatpush2.msra.mxu0 0.0
    %184 = vmatprep.subr.mxu0 0.0
    %185 = vmatpush2.msra.mxu0 0.0
    %186 = vmatprep.subr.mxu0 0.0
    %187 = vmatpush2.msra.mxu0 0.0
    %188 = vmatprep.subr.mxu0 0.0
    %189 = vmatpush2.msra.mxu0 0.0
    %190 = vmatprep.subr.mxu0 0.0
    %191 = vmatpush2.msra.mxu0 0.0
    %192 = vmatprep.subr.mxu0 0.0
    %193 = vmatpush2.msra.mxu0 0.0
    %194 = vmatprep.subr.mxu0 0.0
    %195 = vmatpush2.msra.mxu0 0.0
    %196 = vmatprep.subr.mxu0 0.0
    %197 = vmatpush2.msra.mxu0 0.0
    %198 = vmatprep.subr.mxu0 0.0
    %199 = vmatpush2.msra.mxu0 0.0
    %200 = vmatprep.subr.mxu0 0.0
    %201 = vmatpush2.msra.mxu0 0.0
    %202 = vmatprep.mubr.f32.mxu0 0.0
    %203 = vmatmul.mubr.f32.gmra.mxu0 %v113
    %v204 = vpop.f32.mrf.mxu0
    %v205 = vadd.f32 %v136, %v204
    %v206 = vpop.f32.mrf.mxu0
    %207 = vmatprep.mubr.f32.mxu0 0.0
    %208 = vmatmul.mubr.f32.gmra.mxu0 %v114
    %v209 = vpop.f32.mrf.mxu0
    %v210 = vadd.f32 %v136, %v209
    %v211 = vpop.f32.mrf.mxu0
    %212 = vdwg.mxu0
    %v213 = vmax.f32 %v205, 0.0
    %v214 = vmax.f32 %v210, 0.0
    %v215 = vld [vmem:[#allocation7] sm:$0xff]
    %v216 = vld [vmem:[#allocation7 + $0x8] sm:$0xff]
    %v217 = vld [vmem:[#allocation7 + $0x10] sm:$0xff]
    %v218 = vld [vmem:[#allocation7 + $0x18] sm:$0xff]
    %v219 = vld [vmem:[#allocation7 + $0x20] sm:$0xff]
    %v220 = vld [vmem:[#allocation7 + $0x28] sm:$0xff]
    %v221 = vld [vmem:[#allocation7 + $0x30] sm:$0xff]
    %v222 = vld [vmem:[#allocation7 + $0x38] sm:$0xff]
    %v223 = vld [vmem:[#allocation7 + $0x40] sm:$0xff]
    %v224 = vld [vmem:[#allocation7 + $0x48] sm:$0xff]
    %v225 = vld [vmem:[#allocation7 + $0x50] sm:$0xff]
    %v226 = vld [vmem:[#allocation7 + $0x58] sm:$0xff]
    %v227 = vld [vmem:[#allocation7 + $0x60] sm:$0xff]
    %v228 = vld [vmem:[#allocation7 + $0x68] sm:$0xff]
    %v229 = vld [vmem:[#allocation7 + $0x70] sm:$0xff]
    %v230 = vld [vmem:[#allocation7 + $0x78] sm:$0xff]
    %v231 = vld [vmem:[%s4] sm:$0x1]
    %v233 = vlaneseq
    %v234 = vshrl.u32 %v233, 7
    %v235 = vsub.s32 0, %v234
    %v236 = vrot.slane %v231, %v235
    %238 = vmatprep.subr.mxu0 0.0
    %239 = vmatpush1.msra.mxu0 %v230
    %240 = vmatprep.subr.mxu0 0.0
    %241 = vmatpush1.msra.mxu0 %v229
    %242 = vmatprep.subr.mxu0 0.0
    %243 = vmatpush1.msra.mxu0 %v228
    %244 = vmatprep.subr.mxu0 0.0
    %245 = vmatpush1.msra.mxu0 %v227
    %246 = vmatprep.subr.mxu0 0.0
    %247 = vmatpush1.msra.mxu0 %v226
    %248 = vmatprep.subr.mxu0 0.0
    %249 = vmatpush1.msra.mxu0 %v225
    %250 = vmatprep.subr.mxu0 0.0
    %251 = vmatpush1.msra.mxu0 %v224
    %252 = vmatprep.subr.mxu0 0.0
    %253 = vmatpush1.msra.mxu0 %v223
    %254 = vmatprep.subr.mxu0 0.0
    %255 = vmatpush1.msra.mxu0 %v222
    %256 = vmatprep.subr.mxu0 0.0
    %257 = vmatpush1.msra.mxu0 %v221
    %258 = vmatprep.subr.mxu0 0.0
    %259 = vmatpush1.msra.mxu0 %v220
    %260 = vmatprep.subr.mxu0 0.0
    %261 = vmatpush1.msra.mxu0 %v219
    %262 = vmatprep.subr.mxu0 0.0
    %263 = vmatpush1.msra.mxu0 %v218
    %264 = vmatprep.subr.mxu0 0.0
    %265 = vmatpush1.msra.mxu0 %v217
    %266 = vmatprep.subr.mxu0 0.0
    %267 = vmatpush1.msra.mxu0 %v216
    %268 = vmatprep.subr.mxu0 0.0
    %269 = vmatpush1.msra.mxu0 %v215
    %270 = vmatprep.subr.mxu0 0.0
    %271 = vmatpush2.msra.mxu0 0.0
    %272 = vmatprep.subr.mxu0 0.0
    %273 = vmatpush2.msra.mxu0 0.0
    %274 = vmatprep.subr.mxu0 0.0
    %275 = vmatpush2.msra.mxu0 0.0
    %276 = vmatprep.subr.mxu0 0.0
    %277 = vmatpush2.msra.mxu0 0.0
    %278 = vmatprep.subr.mxu0 0.0
    %279 = vmatpush2.msra.mxu0 0.0
    %280 = vmatprep.subr.mxu0 0.0
    %281 = vmatpush2.msra.mxu0 0.0
    %282 = vmatprep.subr.mxu0 0.0
    %283 = vmatpush2.msra.mxu0 0.0
    %284 = vmatprep.subr.mxu0 0.0
    %285 = vmatpush2.msra.mxu0 0.0
    %286 = vmatprep.subr.mxu0 0.0
    %287 = vmatpush2.msra.mxu0 0.0
    %288 = vmatprep.subr.mxu0 0.0
    %289 = vmatpush2.msra.mxu0 0.0
    %290 = vmatprep.subr.mxu0 0.0
    %291 = vmatpush2.msra.mxu0 0.0
    %292 = vmatprep.subr.mxu0 0.0
    %293 = vmatpush2.msra.mxu0 0.0
    %294 = vmatprep.subr.mxu0 0.0
    %295 = vmatpush2.msra.mxu0 0.0
    %296 = vmatprep.subr.mxu0 0.0
    %297 = vmatpush2.msra.mxu0 0.0
    %298 = vmatprep.subr.mxu0 0.0
    %299 = vmatpush2.msra.mxu0 0.0
    %300 = vmatprep.subr.mxu0 0.0
    %301 = vmatpush2.msra.mxu0 0.0
    %302 = vmatprep.mubr.f32.mxu0 0.0
    %303 = vmatmul.mubr.f32.gmra.mxu0 %v213
    %v304 = vpop.f32.mrf.mxu0
    %v305 = vadd.f32 %v236, %v304
    %v306 = vpop.f32.mrf.mxu0
    %307 = vmatprep.mubr.f32.mxu0 0.0
    %308 = vmatmul.mubr.f32.gmra.mxu0 %v214
    %v309 = vpop.f32.mrf.mxu0
    %v310 = vadd.f32 %v236, %v309
    %v311 = vpop.f32.mrf.mxu0
    %312 = vdwg.mxu0
    %v313 = vadd.f32 %v305, %v68
    %v314 = vadd.f32 %v310, %v69
    %315 = vst [vmem:[#allocation8] sm:$0xff] %v313
    %316 = vst [vmem:[#allocation8 + $0x8] sm:$0xff] %v314
    // Predicated region
    $region42: #{tpu_custom_call.1} parent=1 // pred_check
      _
    $region43: #{tpu_custom_call.1} parent=1 // pred_check_branch
      %318 = sbr.rel (0) target = $region45
    $region44: #{tpu_custom_call.1} parent=1 // pred_region
      %s320 = ssub.s32 256, 256
      %321 = vsyncadd [#allocation4], %s320
      %s322 = sshll.u32 [#allocation8], 4
      %s323 = int_to_ptr.vmem [resolvable:$true] %s322
      %328 = dma.vmem_to_hbm [thread:$0]  %s323, 256, %s7, [#allocation4], 128, 128, 8
    $region45: #{tpu_custom_call.1} parent=1 // pred_fallthru
      _
    // Predicated region
    $region46: #{tpu_custom_call.1} parent=1 // pred_check
      _
    $region47: #{tpu_custom_call.1} parent=1 // pred_check_branch
      %330 = sbr.rel (0) target = $region49
    $region48: #{tpu_custom_call.1} parent=1 // pred_region
      %331 = dma.done [#allocation4], 256
    $region49: #{tpu_custom_call.1} parent=1 // pred_fallthru
      _
    %332 = vsyncpa [#allocation3], 1
    %333 = vsyncpa [#allocation6], 1
    %334 = vsyncpa [#allocation4], 1

</llo_original>
